<compile_context>
chip_gen: v6e
topology: v6e:2x2x1
jax: 0.10.0
libtpu: 0.0.40
codegen_flags: <defaults>
</compile_context>

<pallas_src>
import functools

import jax
import jax.numpy as jnp
from jax import lax
from jax.experimental import pallas as pl
from jax.experimental.pallas import tpu as pltpu


def _round_up(n, m):
    return ((n + m - 1) // m) * m


def _pad_to(arr, shape):
    pads = [(0, s - d) for d, s in zip(arr.shape, shape)]
    return jnp.pad(arr, pads)


def _num_tensorcores_per_chip():
    """Best-effort detection of 2-TC chips (v7x). Defaults to 1 (v5e/v6e)."""
    try:
        kind = (getattr(jax.devices()[0], "device_kind", "") or "").lower()
        if "v7" in kind:
            return 2
    except Exception:
        pass
    return 1


def _vanilla_rnn_kernel(x_ref, u_ref, wt_ref, bh_ref, vt_ref, bp_ref,
                        h_out_ref, out_ref, *, seq_length):
    """One batch tile: full recurrence + readout, everything resident in VMEM.

    Shapes seen by the kernel (Hp / Cp are 128-lane padded, bt is an
    8-sublane-padded batch tile):
      x_ref : (bt, seq)        u_ref : (1, Hp)      wt_ref : (Hp, Hp)
      bh_ref: (1, Hp)          vt_ref: (Hp, Cp)     bp_ref : (1, Cp)
      h_out_ref: (bt, Hp)      out_ref: (bt, Cp)
    """
    bt = x_ref.shape[0]
    h_pad = wt_ref.shape[0]

    u_row = u_ref[...]            # (1, Hp)  loop-invariant
    bh = bh_ref[...]              # (1, Hp)  loop-invariant
    wt = wt_ref[...]              # (Hp, Hp) loop-invariant -> MXU-resident RHS

    def step(x_t, h_prev):
        # Per-step input projection (input_dim == 1): rank-1 broadcast FMA on
        # the VPU, computed inline so nothing is materialised per sequence.
        xu_t = x_t * u_row + bh                                  # (bt, Hp)
        hw = jnp.dot(h_prev, wt, preferred_element_type=jnp.float32)
        return jnp.tanh(xu_t + hw)

    h = jnp.zeros((bt, h_pad), dtype=jnp.float32)

    if seq_length <= 64:
        # Short/medium sequence: static unroll gives the scheduler full
        # cross-step visibility; all x slices are static lane slices.
        for t in range(seq_length):
            h = step(x_ref[:, t:t + 1], h)
    else:
        # Long sequence: visible loop with a deep unroll so the next step's
        # input projection / LHS feed overlaps the current step's tanh.
        x_all = x_ref[...]                                       # (bt, seq)

        def body(t, h_carry):
            x_t = lax.dynamic_slice_in_dim(x_all, t, 1, axis=1)  # (bt, 1)
            return step(x_t, h_carry)

        h = lax.fori_loop(0, seq_length, body, h, unroll=8)
        # TODO(synk): for very long sequences, stream x in seq-chunks with a
        # manual double-buffered DMA instead of one full-array VMEM block.

    # Lane-dense stores; the wrapper slices the padding back off.
    h_out_ref[...] = h
    out_ref[...] = (jnp.dot(h, vt_ref[...], preferred_element_type=jnp.float32)
                    + bp_ref[...])


def vanilla_rnn_forward(x, U, W, V, bh, bp, *, seq_length, input_dim):
    """Wrapper: parameter padding / layout glue + pallas_call."""
    if x.shape[1] != seq_length:
        raise ValueError('sequence length is {}, but {} is expected'.format(
            x.shape[1], seq_length))
    if input_dim != 1:
        # The reference forward slices x[:, t:t+input_dim] from a (B, L) tensor,
        # which is only well-defined for input_dim == 1.
        raise ValueError('only input_dim == 1 is supported')

    batch = x.shape[0]
    num_hidden = U.shape[0]
    num_classes = V.shape[0]
    h_p = _round_up(num_hidden, 128)
    c_p = _round_up(num_classes, 128)

    # Batch tiling: pad to 8 sublanes.  Split across a "parallel" grid axis
    # only on 2-TC chips (v7x) with enough rows per core; on 1-TC chips a
    # single tile keeps the latency-bound recurrence from being serialized.
    batch_p = _round_up(batch, 8)
    num_tc = _num_tensorcores_per_chip()
    num_tiles = num_tc if (num_tc > 1 and batch_p >= 8 * num_tc) else 1
    batch_p = _round_up(batch_p, 8 * num_tiles)
    bt = batch_p // num_tiles

    # Layout / padding glue (zero padding is a mathematical no-op for the rows
    # we keep: each batch row's recurrence is independent, tanh(0) = 0 and the
    # padded rows / cols of W^T, V^T are zero).
    x_p = _pad_to(x.astype(jnp.float32), (batch_p, seq_length))        # (Bp, S)
    u_row = _pad_to(U[:, 0].reshape(1, num_hidden).astype(jnp.float32),
                    (1, h_p))                                           # (1, Hp)
    wt = _pad_to(W.T.astype(jnp.float32), (h_p, h_p))                   # (Hp, Hp)
    bh_p = _pad_to(bh.reshape(1, -1).astype(jnp.float32), (1, h_p))     # (1, Hp)
    vt = _pad_to(V.T.astype(jnp.float32), (h_p, c_p))                   # (Hp, Cp)
    bp_p = _pad_to(bp.reshape(1, -1).astype(jnp.float32), (1, c_p))     # (1, Cp)

    # VMEM budget from the actual per-tile footprint (x2 for double-buffered
    # pipelined refs + headroom) instead of a fixed 32 MiB request.
    fp_bytes = 4 * (bt * seq_length + h_p + h_p * h_p + h_p
                    + h_p * c_p + c_p + bt * h_p + bt * c_p)
    vmem_limit = int(min(96 * 2 ** 20, max(8 * 2 ** 20, 2 * fp_bytes + (1 << 20))))

    kernel = functools.partial(_vanilla_rnn_kernel, seq_length=seq_length)

    h_pad_out, out_pad = pl.pallas_call(
        kernel,
        out_shape=(jax.ShapeDtypeStruct((batch_p, h_p), jnp.float32),
                   jax.ShapeDtypeStruct((batch_p, c_p), jnp.float32)),
        grid=(num_tiles,),
        in_specs=[
            pl.BlockSpec((bt, seq_length), lambda i: (i, 0)),   # x tile
            pl.BlockSpec((1, h_p), lambda i: (0, 0)),           # U row
            pl.BlockSpec((h_p, h_p), lambda i: (0, 0)),         # W^T
            pl.BlockSpec((1, h_p), lambda i: (0, 0)),           # bh
            pl.BlockSpec((h_p, c_p), lambda i: (0, 0)),         # V^T
            pl.BlockSpec((1, c_p), lambda i: (0, 0)),           # bp
        ],
        out_specs=(pl.BlockSpec((bt, h_p), lambda i: (i, 0)),
                   pl.BlockSpec((bt, c_p), lambda i: (i, 0))),
        compiler_params=pltpu.CompilerParams(
            dimension_semantics=("parallel",),
            vmem_limit_bytes=vmem_limit),
    )(x_p, u_row, wt, bh_p, vt, bp_p)

    # Slice the sublane / lane padding back off.
    h_last = h_pad_out[:batch, :num_hidden]
    output = out_pad[:batch, :num_classes]
    return h_last, output


def _xavier_normal(key, shape):
    fan_out, fan_in = shape
    std = (2.0 / (fan_in + fan_out)) ** 0.5
    return std * jax.random.normal(key, shape, dtype=jnp.float32)


def _reference_forward(x, U, W, V, bh, bp, seq_length, input_dim):
    """Pure-JAX reference mirroring the PyTorch forward, for verification."""
    batch = x.shape[0]
    hp = lax.Precision.HIGHEST
    h = jnp.zeros((batch, U.shape[0]), dtype=jnp.float32)
    for t in range(seq_length):
        x_t = x[:, t:t + input_dim].reshape(batch, input_dim)
        h = jnp.tanh(jnp.dot(x_t, U.T, precision=hp)
                     + jnp.dot(h, W.T, precision=hp) + bh)
    out = jnp.dot(h, V.T, precision=hp) + bp
    return h, out


def _run_case(key, *, batch, seq_length, num_hidden, num_classes):
    input_dim = 1          # required for x[:, t:t+input_dim] to be well-defined
    k_x, k_u, k_v, k_w = jax.random.split(key, 4)

    x = jax.random.normal(k_x, (batch, seq_length), dtype=jnp.float32)
    # Deterministic parameter init matching nn.init.* in __init__.
    U = _xavier_normal(k_u, (num_hidden, input_dim))
    V = _xavier_normal(k_v, (num_classes, num_hidden))
    W = _xavier_normal(k_w, (num_hidden, num_hidden))
    bh = jnp.zeros((num_hidden,), dtype=jnp.float32)
    bp = jnp.zeros((num_classes,), dtype=jnp.float32)

    h_last, output = vanilla_rnn_forward(
        x, U, W, V, bh, bp, seq_length=seq_length, input_dim=input_dim)
    jax.block_until_ready((h_last, output))

    h_ref, out_ref = _reference_forward(x, U, W, V, bh, bp, seq_length, input_dim)
    assert h_last.shape == (batch, num_hidden)
    assert output.shape == (batch, num_classes)
    assert jnp.allclose(h_last, h_ref, atol=1e-4, rtol=1e-4)
    assert jnp.allclose(output, out_ref, atol=1e-4, rtol=1e-4)


if __name__ == "__main__":
    key = jax.random.PRNGKey(0)
    k0, k1 = jax.random.split(key)

    # Small demo case: static-unroll path, single batch tile.
    _run_case(k0, batch=8, seq_length=8, num_hidden=32, num_classes=10)
    # Longer-sequence case: exercises the fori_loop path (and batch padding).
    _run_case(k1, batch=16, seq_length=80, num_hidden=32, num_classes=10)

    # TODO(synk): self.hidden_states / self.hidden_weights bookkeeping and
    # retain_grad() are autograd-side effects with no forward-pass equivalent.

    print("KERNEL_OK")
</pallas_src>

<mosaic_0001>
module attributes {stable_mosaic.version = 11 : i64} {
  func.func @_vanilla_rnn_kernel(%arg0: i32, %arg1: memref<8x8xf32, #tpu.memory_space<vmem>>, %arg2: memref<1x128xf32, #tpu.memory_space<vmem>>, %arg3: memref<128x128xf32, #tpu.memory_space<vmem>>, %arg4: memref<1x128xf32, #tpu.memory_space<vmem>>, %arg5: memref<128x128xf32, #tpu.memory_space<vmem>>, %arg6: memref<1x128xf32, #tpu.memory_space<vmem>>, %arg7: memref<8x128xf32, #tpu.memory_space<vmem>>, %arg8: memref<8x128xf32, #tpu.memory_space<vmem>>) attributes {dimension_semantics = [#tpu.dimension_semantics<parallel>], iteration_bounds = array<i64: 1>, scalar_prefetch = 0 : i64, scratch_operands = 0 : i64, tpu.core_type = #tpu.core_type<tc>, window_params = [{transform_indices = @transform_0, window_bounds = array<i64: 8, 8>}, {pipeline_mode = #tpu.pipeline_mode<synchronous>, transform_indices = @transform_1, window_bounds = array<i64: 1, 128>}, {pipeline_mode = #tpu.pipeline_mode<synchronous>, transform_indices = @transform_2, window_bounds = array<i64: 128, 128>}, {pipeline_mode = #tpu.pipeline_mode<synchronous>, transform_indices = @transform_3, window_bounds = array<i64: 1, 128>}, {pipeline_mode = #tpu.pipeline_mode<synchronous>, transform_indices = @transform_4, window_bounds = array<i64: 128, 128>}, {pipeline_mode = #tpu.pipeline_mode<synchronous>, transform_indices = @transform_5, window_bounds = array<i64: 1, 128>}, {transform_indices = @transform_6, window_bounds = array<i64: 8, 128>}, {transform_indices = @transform_7, window_bounds = array<i64: 8, 128>}]} {
    %c0 = arith.constant 0 : index
    %c0_0 = arith.constant 0 : index
    %0 = vector.load %arg2[%c0, %c0_0] : memref<1x128xf32, #tpu.memory_space<vmem>>, vector<1x128xf32>
    %c0_1 = arith.constant 0 : index
    %c0_2 = arith.constant 0 : index
    %1 = vector.load %arg4[%c0_1, %c0_2] : memref<1x128xf32, #tpu.memory_space<vmem>>, vector<1x128xf32>
    %c0_3 = arith.constant 0 : index
    %c0_4 = arith.constant 0 : index
    %2 = vector.load %arg3[%c0_3, %c0_4] : memref<128x128xf32, #tpu.memory_space<vmem>>, vector<128x128xf32>
    %cst = arith.constant 0.000000e+00 : f32
    %3 = vector.broadcast %cst : f32 to vector<8x128xf32>
    %c0_5 = arith.constant 0 : index
    %c0_6 = arith.constant 0 : index
    %4 = vector.load %arg1[%c0_5, %c0_6] : memref<8x8xf32, #tpu.memory_space<vmem>>, vector<8x1xf32>
    %5 = vector.broadcast %4 : vector<8x1xf32> to vector<8x128xf32>
    %6 = vector.broadcast %0 : vector<1x128xf32> to vector<8x128xf32>
    %7 = arith.mulf %5, %6 : vector<8x128xf32>
    %8 = vector.broadcast %1 : vector<1x128xf32> to vector<8x128xf32>
    %9 = arith.addf %7, %8 : vector<8x128xf32>
    %cst_7 = arith.constant dense<0.000000e+00> : vector<8x128xf32>
    %10 = tpu.matmul %3, %2, %cst_7 {dimension_numbers = #tpu.dot_dimension_numbers<[1], [0], [0], [1], [0, 0, 1, 1], [], []>} : vector<8x128xf32>, vector<128x128xf32>, vector<8x128xf32> -> vector<8x128xf32>
    %11 = arith.addf %9, %10 : vector<8x128xf32>
    %12 = math.tanh %11 : vector<8x128xf32>
    %c0_8 = arith.constant 0 : index
    %c1 = arith.constant 1 : index
    %13 = vector.load %arg1[%c0_8, %c1] : memref<8x8xf32, #tpu.memory_space<vmem>>, vector<8x1xf32>
    %14 = vector.broadcast %13 : vector<8x1xf32> to vector<8x128xf32>
    %15 = vector.broadcast %0 : vector<1x128xf32> to vector<8x128xf32>
    %16 = arith.mulf %14, %15 : vector<8x128xf32>
    %17 = vector.broadcast %1 : vector<1x128xf32> to vector<8x128xf32>
    %18 = arith.addf %16, %17 : vector<8x128xf32>
    %cst_9 = arith.constant dense<0.000000e+00> : vector<8x128xf32>
    %19 = tpu.matmul %12, %2, %cst_9 {dimension_numbers = #tpu.dot_dimension_numbers<[1], [0], [0], [1], [0, 0, 1, 1], [], []>} : vector<8x128xf32>, vector<128x128xf32>, vector<8x128xf32> -> vector<8x128xf32>
    %20 = arith.addf %18, %19 : vector<8x128xf32>
    %21 = math.tanh %20 : vector<8x128xf32>
    %c0_10 = arith.constant 0 : index
    %c2 = arith.constant 2 : index
    %22 = vector.load %arg1[%c0_10, %c2] : memref<8x8xf32, #tpu.memory_space<vmem>>, vector<8x1xf32>
    %23 = vector.broadcast %22 : vector<8x1xf32> to vector<8x128xf32>
    %24 = vector.broadcast %0 : vector<1x128xf32> to vector<8x128xf32>
    %25 = arith.mulf %23, %24 : vector<8x128xf32>
    %26 = vector.broadcast %1 : vector<1x128xf32> to vector<8x128xf32>
    %27 = arith.addf %25, %26 : vector<8x128xf32>
    %cst_11 = arith.constant dense<0.000000e+00> : vector<8x128xf32>
    %28 = tpu.matmul %21, %2, %cst_11 {dimension_numbers = #tpu.dot_dimension_numbers<[1], [0], [0], [1], [0, 0, 1, 1], [], []>} : vector<8x128xf32>, vector<128x128xf32>, vector<8x128xf32> -> vector<8x128xf32>
    %29 = arith.addf %27, %28 : vector<8x128xf32>
    %30 = math.tanh %29 : vector<8x128xf32>
    %c0_12 = arith.constant 0 : index
    %c3 = arith.constant 3 : index
    %31 = vector.load %arg1[%c0_12, %c3] : memref<8x8xf32, #tpu.memory_space<vmem>>, vector<8x1xf32>
    %32 = vector.broadcast %31 : vector<8x1xf32> to vector<8x128xf32>
    %33 = vector.broadcast %0 : vector<1x128xf32> to vector<8x128xf32>
    %34 = arith.mulf %32, %33 : vector<8x128xf32>
    %35 = vector.broadcast %1 : vector<1x128xf32> to vector<8x128xf32>
    %36 = arith.addf %34, %35 : vector<8x128xf32>
    %cst_13 = arith.constant dense<0.000000e+00> : vector<8x128xf32>
    %37 = tpu.matmul %30, %2, %cst_13 {dimension_numbers = #tpu.dot_dimension_numbers<[1], [0], [0], [1], [0, 0, 1, 1], [], []>} : vector<8x128xf32>, vector<128x128xf32>, vector<8x128xf32> -> vector<8x128xf32>
    %38 = arith.addf %36, %37 : vector<8x128xf32>
    %39 = math.tanh %38 : vector<8x128xf32>
    %c0_14 = arith.constant 0 : index
    %c4 = arith.constant 4 : index
    %40 = vector.load %arg1[%c0_14, %c4] : memref<8x8xf32, #tpu.memory_space<vmem>>, vector<8x1xf32>
    %41 = vector.broadcast %40 : vector<8x1xf32> to vector<8x128xf32>
    %42 = vector.broadcast %0 : vector<1x128xf32> to vector<8x128xf32>
    %43 = arith.mulf %41, %42 : vector<8x128xf32>
    %44 = vector.broadcast %1 : vector<1x128xf32> to vector<8x128xf32>
    %45 = arith.addf %43, %44 : vector<8x128xf32>
    %cst_15 = arith.constant dense<0.000000e+00> : vector<8x128xf32>
    %46 = tpu.matmul %39, %2, %cst_15 {dimension_numbers = #tpu.dot_dimension_numbers<[1], [0], [0], [1], [0, 0, 1, 1], [], []>} : vector<8x128xf32>, vector<128x128xf32>, vector<8x128xf32> -> vector<8x128xf32>
    %47 = arith.addf %45, %46 : vector<8x128xf32>
    %48 = math.tanh %47 : vector<8x128xf32>
    %c0_16 = arith.constant 0 : index
    %c5 = arith.constant 5 : index
    %49 = vector.load %arg1[%c0_16, %c5] : memref<8x8xf32, #tpu.memory_space<vmem>>, vector<8x1xf32>
    %50 = vector.broadcast %49 : vector<8x1xf32> to vector<8x128xf32>
    %51 = vector.broadcast %0 : vector<1x128xf32> to vector<8x128xf32>
    %52 = arith.mulf %50, %51 : vector<8x128xf32>
    %53 = vector.broadcast %1 : vector<1x128xf32> to vector<8x128xf32>
    %54 = arith.addf %52, %53 : vector<8x128xf32>
    %cst_17 = arith.constant dense<0.000000e+00> : vector<8x128xf32>
    %55 = tpu.matmul %48, %2, %cst_17 {dimension_numbers = #tpu.dot_dimension_numbers<[1], [0], [0], [1], [0, 0, 1, 1], [], []>} : vector<8x128xf32>, vector<128x128xf32>, vector<8x128xf32> -> vector<8x128xf32>
    %56 = arith.addf %54, %55 : vector<8x128xf32>
    %57 = math.tanh %56 : vector<8x128xf32>
    %c0_18 = arith.constant 0 : index
    %c6 = arith.constant 6 : index
    %58 = vector.load %arg1[%c0_18, %c6] : memref<8x8xf32, #tpu.memory_space<vmem>>, vector<8x1xf32>
    %59 = vector.broadcast %58 : vector<8x1xf32> to vector<8x128xf32>
    %60 = vector.broadcast %0 : vector<1x128xf32> to vector<8x128xf32>
    %61 = arith.mulf %59, %60 : vector<8x128xf32>
    %62 = vector.broadcast %1 : vector<1x128xf32> to vector<8x128xf32>
    %63 = arith.addf %61, %62 : vector<8x128xf32>
    %cst_19 = arith.constant dense<0.000000e+00> : vector<8x128xf32>
    %64 = tpu.matmul %57, %2, %cst_19 {dimension_numbers = #tpu.dot_dimension_numbers<[1], [0], [0], [1], [0, 0, 1, 1], [], []>} : vector<8x128xf32>, vector<128x128xf32>, vector<8x128xf32> -> vector<8x128xf32>
    %65 = arith.addf %63, %64 : vector<8x128xf32>
    %66 = math.tanh %65 : vector<8x128xf32>
    %c0_20 = arith.constant 0 : index
    %c7 = arith.constant 7 : index
    %67 = vector.load %arg1[%c0_20, %c7] : memref<8x8xf32, #tpu.memory_space<vmem>>, vector<8x1xf32>
    %68 = vector.broadcast %67 : vector<8x1xf32> to vector<8x128xf32>
    %69 = vector.broadcast %0 : vector<1x128xf32> to vector<8x128xf32>
    %70 = arith.mulf %68, %69 : vector<8x128xf32>
    %71 = vector.broadcast %1 : vector<1x128xf32> to vector<8x128xf32>
    %72 = arith.addf %70, %71 : vector<8x128xf32>
    %cst_21 = arith.constant dense<0.000000e+00> : vector<8x128xf32>
    %73 = tpu.matmul %66, %2, %cst_21 {dimension_numbers = #tpu.dot_dimension_numbers<[1], [0], [0], [1], [0, 0, 1, 1], [], []>} : vector<8x128xf32>, vector<128x128xf32>, vector<8x128xf32> -> vector<8x128xf32>
    %74 = arith.addf %72, %73 : vector<8x128xf32>
    %75 = math.tanh %74 : vector<8x128xf32>
    %c0_22 = arith.constant 0 : index
    %c0_23 = arith.constant 0 : index
    %76 = vector.load %arg7[%c0_22, %c0_23] : memref<8x128xf32, #tpu.memory_space<vmem>>, vector<8x128xf32>
    tpu.vector_store %arg7[%c0_22, %c0_23], %75 {strides = array<i32>} : memref<8x128xf32, #tpu.memory_space<vmem>>, vector<8x128xf32>,
    %c0_24 = arith.constant 0 : index
    %c0_25 = arith.constant 0 : index
    %77 = vector.load %arg5[%c0_24, %c0_25] : memref<128x128xf32, #tpu.memory_space<vmem>>, vector<128x128xf32>
    %cst_26 = arith.constant dense<0.000000e+00> : vector<8x128xf32>
    %78 = tpu.matmul %75, %77, %cst_26 {dimension_numbers = #tpu.dot_dimension_numbers<[1], [0], [0], [1], [0, 0, 1, 1], [], []>} : vector<8x128xf32>, vector<128x128xf32>, vector<8x128xf32> -> vector<8x128xf32>
    %c0_27 = arith.constant 0 : index
    %c0_28 = arith.constant 0 : index
    %79 = vector.load %arg6[%c0_27, %c0_28] : memref<1x128xf32, #tpu.memory_space<vmem>>, vector<1x128xf32>
    %80 = vector.broadcast %79 : vector<1x128xf32> to vector<8x128xf32>
    %81 = arith.addf %78, %80 : vector<8x128xf32>
    %c0_29 = arith.constant 0 : index
    %c0_30 = arith.constant 0 : index
    %82 = vector.load %arg8[%c0_29, %c0_30] : memref<8x128xf32, #tpu.memory_space<vmem>>, vector<8x128xf32>
    tpu.vector_store %arg8[%c0_29, %c0_30], %81 {strides = array<i32>} : memref<8x128xf32, #tpu.memory_space<vmem>>, vector<8x128xf32>,
    return
  }
  func.func @transform_0(%arg0: i32) -> (i32, i32) {
    %c0_i32 = arith.constant 0 : i32
    %c0_i32_0 = arith.constant 0 : i32
    return %arg0, %c0_i32 : i32, i32
  }
  func.func @transform_1(%arg0: i32) -> (i32, i32) {
    %c0_i32 = arith.constant 0 : i32
    %c0_i32_0 = arith.constant 0 : i32
    %c0_i32_1 = arith.constant 0 : i32
    return %c0_i32, %c0_i32_0 : i32, i32
  }
  func.func @transform_2(%arg0: i32) -> (i32, i32) {
    %c0_i32 = arith.constant 0 : i32
    %c0_i32_0 = arith.constant 0 : i32
    %c0_i32_1 = arith.constant 0 : i32
    return %c0_i32, %c0_i32_0 : i32, i32
  }
  func.func @transform_3(%arg0: i32) -> (i32, i32) {
    %c0_i32 = arith.constant 0 : i32
    %c0_i32_0 = arith.constant 0 : i32
    %c0_i32_1 = arith.constant 0 : i32
    return %c0_i32, %c0_i32_0 : i32, i32
  }
  func.func @transform_4(%arg0: i32) -> (i32, i32) {
    %c0_i32 = arith.constant 0 : i32
    %c0_i32_0 = arith.constant 0 : i32
    %c0_i32_1 = arith.constant 0 : i32
    return %c0_i32, %c0_i32_0 : i32, i32
  }
  func.func @transform_5(%arg0: i32) -> (i32, i32) {
    %c0_i32 = arith.constant 0 : i32
    %c0_i32_0 = arith.constant 0 : i32
    %c0_i32_1 = arith.constant 0 : i32
    return %c0_i32, %c0_i32_0 : i32, i32
  }
  func.func @transform_6(%arg0: i32) -> (i32, i32) {
    %c0_i32 = arith.constant 0 : i32
    %c0_i32_0 = arith.constant 0 : i32
    return %arg0, %c0_i32 : i32, i32
  }
  func.func @transform_7(%arg0: i32) -> (i32, i32) {
    %c0_i32 = arith.constant 0 : i32
    %c0_i32_0 = arith.constant 0 : i32
    return %arg0, %c0_i32 : i32, i32
  }
}

</mosaic_0001>

<llo_original>
// kernel: tpu_custom_call.1
$region0: #{tpu_custom_call.1}
  #allocation0 [shape = 'u32[]', space=smem, size = 0x4, offset = 0x4, fixed_abs, tag = 'smem constant byte address 0x4 - core index']
  #allocation1 [shape = 'u32[144,128]{1,0:T(1,128)}', space=vmem, size = 0x12000, scoped, tag = 'internal scratch']
  %s0 = inlined_call_operand.hbm [shape: f32[8,8], index: 0, kind: input, shape index: {}]
  %s1 = inlined_call_operand.vmem [shape: f32[1,128], index: 1, kind: input, shape index: {}]
  %s2 = inlined_call_operand.hbm [shape: f32[128,128], index: 2, kind: input, shape index: {}]
  %s3 = inlined_call_operand.vmem [shape: f32[1,128], index: 3, kind: input, shape index: {}]
  %s4 = inlined_call_operand.hbm [shape: f32[128,128], index: 4, kind: input, shape index: {}]
  %s5 = inlined_call_operand.vmem [shape: f32[1,128], index: 5, kind: input, shape index: {}]
  %s6 = inlined_call_operand.hbm [shape: f32[8,128], index: 6, kind: output, shape index: {0}]
  %s7 = inlined_call_operand.hbm [shape: f32[8,128], index: 7, kind: output, shape index: {1}]
  %8 = xla_tuple %s6, %s7
  %s9 = sld [smem:[#allocation0]]
  $region54: #{tpu_custom_call.1} parent=0
    _
  %s11 = ssub.s32 1, %s9
  %s12 = scalar_select 0, %s11, %s9
  $region1: #{tpu_custom_call.1} parent=0
    #allocation2 [shape = 'u8[4096]{0}', space=vmem, size = 0x1000, scoped, tag = 'input window, operand 0, single buffered']
    #allocation3 [shape = 's32[1]{0}', space=sflag, size = 0x4, scoped, tag = 'scoped memory for tpu_custom_call.1']
    #allocation4 [shape = 's32[1]{0}', space=sflag, size = 0x4, scoped, tag = 'scoped memory for tpu_custom_call.1']
    #allocation5 [shape = 'u8[65536]{0}', space=vmem, size = 0x10000, scoped, tag = 'input window, operand 2, single buffered']
    #allocation6 [shape = 's32[1]{0}', space=sflag, size = 0x4, scoped, tag = 'scoped memory for tpu_custom_call.1']
    #allocation7 [shape = 'u8[65536]{0}', space=vmem, size = 0x10000, scoped, tag = 'input window, operand 4, single buffered']
    #allocation8 [shape = 'u8[4096]{0}', space=vmem, size = 0x1000, scoped, tag = 'output window, operand 0, single buffered']
    #allocation9 [shape = 'u8[4096]{0}', space=vmem, size = 0x1000, scoped, tag = 'output window, operand 1, single buffered']
    #allocation10 [shape = 's32[1]{0}', space=sflag, size = 0x4, scoped, tag = 'scoped memory for tpu_custom_call.1']
    %13 = vsyncpa [#allocation3], 0
    %14 = vsyncpa [#allocation6], 0
    %15 = vsyncpa [#allocation4], 0
    %16 = vsyncpa [#allocation10], 0
    // Predicated region
    $region2: #{tpu_custom_call.1} parent=1 // pred_check
      _
    $region3: #{tpu_custom_call.1} parent=1 // pred_check_branch
      %18 = sbr.rel (0) target = $region5
    $region4: #{tpu_custom_call.1} parent=1 // pred_region
      %s20 = ssub.s32 128, 128
      %21 = vsyncadd [#allocation3], %s20
      %s23 = sshll.u32 [#allocation2], 4
      %s24 = int_to_ptr.vmem [resolvable:$true] %s23
      %26 = dma.hbm_to_vmem [thread:$0]  %s0, 128, %s24, [#allocation3]
    $region5: #{tpu_custom_call.1} parent=1 // pred_fallthru
      _
    // Predicated region
    $region6: #{tpu_custom_call.1} parent=1 // pred_check
      _
    $region7: #{tpu_custom_call.1} parent=1 // pred_check_branch
      %28 = sbr.rel (0) target = $region9
    $region8: #{tpu_custom_call.1} parent=1 // pred_region
      _
    $region9: #{tpu_custom_call.1} parent=1 // pred_fallthru
      _
    // Predicated region
    $region10: #{tpu_custom_call.1} parent=1 // pred_check
      _
    $region11: #{tpu_custom_call.1} parent=1 // pred_check_branch
      %30 = sbr.rel (0) target = $region13
    $region12: #{tpu_custom_call.1} parent=1 // pred_region
      %s32 = ssub.s32 2048, 2048
      %33 = vsyncadd [#allocation6], %s32
      %s34 = sshll.u32 [#allocation5], 4
      %s35 = int_to_ptr.vmem [resolvable:$true] %s34
      %40 = dma.hbm_to_vmem [thread:$0]  %s2, 2048, %s35, [#allocation6], 128, 128, 8
    $region13: #{tpu_custom_call.1} parent=1 // pred_fallthru
      _
    // Predicated region
    $region14: #{tpu_custom_call.1} parent=1 // pred_check
      _
    $region15: #{tpu_custom_call.1} parent=1 // pred_check_branch
      %42 = sbr.rel (0) target = $region17
    $region16: #{tpu_custom_call.1} parent=1 // pred_region
      _
    $region17: #{tpu_custom_call.1} parent=1 // pred_fallthru
      _
    // Predicated region
    $region18: #{tpu_custom_call.1} parent=1 // pred_check
      _
    $region19: #{tpu_custom_call.1} parent=1 // pred_check_branch
      %44 = sbr.rel (0) target = $region21
    $region20: #{tpu_custom_call.1} parent=1 // pred_region
      %s46 = ssub.s32 2048, 2048
      %47 = vsyncadd [#allocation6], %s46
      %s48 = sshll.u32 [#allocation7], 4
      %s49 = int_to_ptr.vmem [resolvable:$true] %s48
      %54 = dma.hbm_to_vmem [thread:$0]  %s4, 2048, %s49, [#allocation6], 128, 128, 8
    $region21: #{tpu_custom_call.1} parent=1 // pred_fallthru
      _
    // Predicated region
    $region22: #{tpu_custom_call.1} parent=1 // pred_check
      _
    $region23: #{tpu_custom_call.1} parent=1 // pred_check_branch
      %56 = sbr.rel (0) target = $region25
    $region24: #{tpu_custom_call.1} parent=1 // pred_region
      _
    $region25: #{tpu_custom_call.1} parent=1 // pred_fallthru
      _
    // Predicated region
    $region26: #{tpu_custom_call.1} parent=1 // pred_check
      _
    $region27: #{tpu_custom_call.1} parent=1 // pred_check_branch
      %58 = sbr.rel (0) target = $region29
    $region28: #{tpu_custom_call.1} parent=1 // pred_region
      %59 = dma.done [#allocation3], 128
    $region29: #{tpu_custom_call.1} parent=1 // pred_fallthru
      _
    // Predicated region
    $region30: #{tpu_custom_call.1} parent=1 // pred_check
      _
    $region31: #{tpu_custom_call.1} parent=1 // pred_check_branch
      %61 = sbr.rel (0) target = $region33
    $region32: #{tpu_custom_call.1} parent=1 // pred_region
      %62 = dma.done [#allocation6], 2048
    $region33: #{tpu_custom_call.1} parent=1 // pred_fallthru
      _
    // Predicated region
    $region34: #{tpu_custom_call.1} parent=1 // pred_check
      _
    $region35: #{tpu_custom_call.1} parent=1 // pred_check_branch
      %64 = sbr.rel (0) target = $region37
    $region36: #{tpu_custom_call.1} parent=1 // pred_region
      %65 = dma.done [#allocation6], 2048
    $region37: #{tpu_custom_call.1} parent=1 // pred_fallthru
      _
    %v66 = vld [vmem:[%s1] sm:$0x1]
    %v67 = vld [vmem:[%s3] sm:$0x1]
    %v68 = vld [vmem:[#allocation5] sm:$0xff]
    %v69 = vld [vmem:[#allocation5 + $0x8] sm:$0xff]
    %v70 = vld [vmem:[#allocation5 + $0x10] sm:$0xff]
    %v71 = vld [vmem:[#allocation5 + $0x18] sm:$0xff]
    %v72 = vld [vmem:[#allocation5 + $0x20] sm:$0xff]
    %v73 = vld [vmem:[#allocation5 + $0x28] sm:$0xff]
    %v74 = vld [vmem:[#allocation5 + $0x30] sm:$0xff]
    %v75 = vld [vmem:[#allocation5 + $0x38] sm:$0xff]
    %v76 = vld [vmem:[#allocation5 + $0x40] sm:$0xff]
    %v77 = vld [vmem:[#allocation5 + $0x48] sm:$0xff]
    %v78 = vld [vmem:[#allocation5 + $0x50] sm:$0xff]
    %v79 = vld [vmem:[#allocation5 + $0x58] sm:$0xff]
    %v80 = vld [vmem:[#allocation5 + $0x60] sm:$0xff]
    %v81 = vld [vmem:[#allocation5 + $0x68] sm:$0xff]
    %v82 = vld [vmem:[#allocation5 + $0x70] sm:$0xff]
    %v83 = vld [vmem:[#allocation5 + $0x78] sm:$0xff]
    %v84 = vld [vmem:[#allocation2] sm:$0xff]
    %86 = vset.pattern.permute.xlu0 0
    %87 = vperm.xlu0 %86, %v84
    %v88 = vpop.permute.xlu0 %87
    %v91 = vlaneseq
    %v92 = vshrl.u32 %v91, 7
    %v93 = vsub.s32 0, %v92
    %v94 = vrot.slane %v66, %v93
    %v96 = vmul.f32 %v88, %v94
    %v98 = vlaneseq
    %v99 = vshrl.u32 %v98, 7
    %v100 = vsub.s32 0, %v99
    %v101 = vrot.slane %v67, %v100
    %v103 = vadd.f32 %v96, %v101
    %104 = vmatprep.subr.mxu0 0.0
    %105 = vmatpush1.msra.mxu0 %v83
    %106 = vmatprep.subr.mxu0 0.0
    %107 = vmatpush1.msra.mxu0 %v82
    %108 = vmatprep.subr.mxu0 0.0
    %109 = vmatpush1.msra.mxu0 %v81
    %110 = vmatprep.subr.mxu0 0.0
    %111 = vmatpush1.msra.mxu0 %v80
    %112 = vmatprep.subr.mxu0 0.0
    %113 = vmatpush1.msra.mxu0 %v79
    %114 = vmatprep.subr.mxu0 0.0
    %115 = vmatpush1.msra.mxu0 %v78
    %116 = vmatprep.subr.mxu0 0.0
    %117 = vmatpush1.msra.mxu0 %v77
    %118 = vmatprep.subr.mxu0 0.0
    %119 = vmatpush1.msra.mxu0 %v76
    %120 = vmatprep.subr.mxu0 0.0
    %121 = vmatpush1.msra.mxu0 %v75
    %122 = vmatprep.subr.mxu0 0.0
    %123 = vmatpush1.msra.mxu0 %v74
    %124 = vmatprep.subr.mxu0 0.0
    %125 = vmatpush1.msra.mxu0 %v73
    %126 = vmatprep.subr.mxu0 0.0
    %127 = vmatpush1.msra.mxu0 %v72
    %128 = vmatprep.subr.mxu0 0.0
    %129 = vmatpush1.msra.mxu0 %v71
    %130 = vmatprep.subr.mxu0 0.0
    %131 = vmatpush1.msra.mxu0 %v70
    %132 = vmatprep.subr.mxu0 0.0
    %133 = vmatpush1.msra.mxu0 %v69
    %134 = vmatprep.subr.mxu0 0.0
    %135 = vmatpush1.msra.mxu0 %v68
    %136 = vmatprep.subr.mxu0 0.0
    %137 = vmatpush2.msra.mxu0 0.0
    %138 = vmatprep.subr.mxu0 0.0
    %139 = vmatpush2.msra.mxu0 0.0
    %140 = vmatprep.subr.mxu0 0.0
    %141 = vmatpush2.msra.mxu0 0.0
    %142 = vmatprep.subr.mxu0 0.0
    %143 = vmatpush2.msra.mxu0 0.0
    %144 = vmatprep.subr.mxu0 0.0
    %145 = vmatpush2.msra.mxu0 0.0
    %146 = vmatprep.subr.mxu0 0.0
    %147 = vmatpush2.msra.mxu0 0.0
    %148 = vmatprep.subr.mxu0 0.0
    %149 = vmatpush2.msra.mxu0 0.0
    %150 = vmatprep.subr.mxu0 0.0
    %151 = vmatpush2.msra.mxu0 0.0
    %152 = vmatprep.subr.mxu0 0.0
    %153 = vmatpush2.msra.mxu0 0.0
    %154 = vmatprep.subr.mxu0 0.0
    %155 = vmatpush2.msra.mxu0 0.0
    %156 = vmatprep.subr.mxu0 0.0
    %157 = vmatpush2.msra.mxu0 0.0
    %158 = vmatprep.subr.mxu0 0.0
    %159 = vmatpush2.msra.mxu0 0.0
    %160 = vmatprep.subr.mxu0 0.0
    %161 = vmatpush2.msra.mxu0 0.0
    %162 = vmatprep.subr.mxu0 0.0
    %163 = vmatpush2.msra.mxu0 0.0
    %164 = vmatprep.subr.mxu0 0.0
    %165 = vmatpush2.msra.mxu0 0.0
    %166 = vmatprep.subr.mxu0 0.0
    %167 = vmatpush2.msra.mxu0 0.0
    %168 = vmatprep.mubr.f32.mxu0 0.0
    %169 = vmatmul.mubr.f32.gmra.mxu0 0.0
    %v170 = vpop.f32.mrf.mxu0
    %v171 = vadd.f32 0.0, %v170
    %v172 = vpop.f32.mrf.mxu0
    %173 = vdwg.mxu0
    %v174 = vadd.f32 %v103, %v171
    %v175 = vtanh.pop %v174
    %176 = vset.pattern.permute.xlu0 1
    %177 = vperm.xlu0 %176, %v84
    %v178 = vpop.permute.xlu0 %177
    %v180 = vmul.f32 %v178, %v94
    %v181 = vadd.f32 %v180, %v101
    %182 = vmatprep.subr.mxu0 0.0
    %183 = vmatpush1.msra.mxu0 %v83
    %184 = vmatprep.subr.mxu0 0.0
    %185 = vmatpush1.msra.mxu0 %v82
    %186 = vmatprep.subr.mxu0 0.0
    %187 = vmatpush1.msra.mxu0 %v81
    %188 = vmatprep.subr.mxu0 0.0
    %189 = vmatpush1.msra.mxu0 %v80
    %190 = vmatprep.subr.mxu0 0.0
    %191 = vmatpush1.msra.mxu0 %v79
    %192 = vmatprep.subr.mxu0 0.0
    %193 = vmatpush1.msra.mxu0 %v78
    %194 = vmatprep.subr.mxu0 0.0
    %195 = vmatpush1.msra.mxu0 %v77
    %196 = vmatprep.subr.mxu0 0.0
    %197 = vmatpush1.msra.mxu0 %v76
    %198 = vmatprep.subr.mxu0 0.0
    %199 = vmatpush1.msra.mxu0 %v75
    %200 = vmatprep.subr.mxu0 0.0
    %201 = vmatpush1.msra.mxu0 %v74
    %202 = vmatprep.subr.mxu0 0.0
    %203 = vmatpush1.msra.mxu0 %v73
    %204 = vmatprep.subr.mxu0 0.0
    %205 = vmatpush1.msra.mxu0 %v72
    %206 = vmatprep.subr.mxu0 0.0
    %207 = vmatpush1.msra.mxu0 %v71
    %208 = vmatprep.subr.mxu0 0.0
    %209 = vmatpush1.msra.mxu0 %v70
    %210 = vmatprep.subr.mxu0 0.0
    %211 = vmatpush1.msra.mxu0 %v69
    %212 = vmatprep.subr.mxu0 0.0
    %213 = vmatpush1.msra.mxu0 %v68
    %214 = vmatprep.subr.mxu0 0.0
    %215 = vmatpush2.msra.mxu0 0.0
    %216 = vmatprep.subr.mxu0 0.0
    %217 = vmatpush2.msra.mxu0 0.0
    %218 = vmatprep.subr.mxu0 0.0
    %219 = vmatpush2.msra.mxu0 0.0
    %220 = vmatprep.subr.mxu0 0.0
    %221 = vmatpush2.msra.mxu0 0.0
    %222 = vmatprep.subr.mxu0 0.0
    %223 = vmatpush2.msra.mxu0 0.0
    %224 = vmatprep.subr.mxu0 0.0
    %225 = vmatpush2.msra.mxu0 0.0
    %226 = vmatprep.subr.mxu0 0.0
    %227 = vmatpush2.msra.mxu0 0.0
    %228 = vmatprep.subr.mxu0 0.0
    %229 = vmatpush2.msra.mxu0 0.0
    %230 = vmatprep.subr.mxu0 0.0
    %231 = vmatpush2.msra.mxu0 0.0
    %232 = vmatprep.subr.mxu0 0.0
    %233 = vmatpush2.msra.mxu0 0.0
    %234 = vmatprep.subr.mxu0 0.0
    %235 = vmatpush2.msra.mxu0 0.0
    %236 = vmatprep.subr.mxu0 0.0
    %237 = vmatpush2.msra.mxu0 0.0
    %238 = vmatprep.subr.mxu0 0.0
    %239 = vmatpush2.msra.mxu0 0.0
    %240 = vmatprep.subr.mxu0 0.0
    %241 = vmatpush2.msra.mxu0 0.0
    %242 = vmatprep.subr.mxu0 0.0
    %243 = vmatpush2.msra.mxu0 0.0
    %244 = vmatprep.subr.mxu0 0.0
    %245 = vmatpush2.msra.mxu0 0.0
    %246 = vmatprep.mubr.f32.mxu0 0.0
    %247 = vmatmul.mubr.f32.gmra.mxu0 %v175
    %v248 = vpop.f32.mrf.mxu0
    %v249 = vadd.f32 0.0, %v248
    %v250 = vpop.f32.mrf.mxu0
    %251 = vdwg.mxu0
    %v252 = vadd.f32 %v181, %v249
    %v253 = vtanh.pop %v252
    %254 = vset.pattern.permute.xlu0 2
    %255 = vperm.xlu0 %254, %v84
    %v256 = vpop.permute.xlu0 %255
    %v258 = vmul.f32 %v256, %v94
    %v259 = vadd.f32 %v258, %v101
    %260 = vmatprep.subr.mxu0 0.0
    %261 = vmatpush1.msra.mxu0 %v83
    %262 = vmatprep.subr.mxu0 0.0
    %263 = vmatpush1.msra.mxu0 %v82
    %264 = vmatprep.subr.mxu0 0.0
    %265 = vmatpush1.msra.mxu0 %v81
    %266 = vmatprep.subr.mxu0 0.0
    %267 = vmatpush1.msra.mxu0 %v80
    %268 = vmatprep.subr.mxu0 0.0
    %269 = vmatpush1.msra.mxu0 %v79
    %270 = vmatprep.subr.mxu0 0.0
    %271 = vmatpush1.msra.mxu0 %v78
    %272 = vmatprep.subr.mxu0 0.0
    %273 = vmatpush1.msra.mxu0 %v77
    %274 = vmatprep.subr.mxu0 0.0
    %275 = vmatpush1.msra.mxu0 %v76
    %276 = vmatprep.subr.mxu0 0.0
    %277 = vmatpush1.msra.mxu0 %v75
    %278 = vmatprep.subr.mxu0 0.0
    %279 = vmatpush1.msra.mxu0 %v74
    %280 = vmatprep.subr.mxu0 0.0
    %281 = vmatpush1.msra.mxu0 %v73
    %282 = vmatprep.subr.mxu0 0.0
    %283 = vmatpush1.msra.mxu0 %v72
    %284 = vmatprep.subr.mxu0 0.0
    %285 = vmatpush1.msra.mxu0 %v71
    %286 = vmatprep.subr.mxu0 0.0
    %287 = vmatpush1.msra.mxu0 %v70
    %288 = vmatprep.subr.mxu0 0.0
    %289 = vmatpush1.msra.mxu0 %v69
    %290 = vmatprep.subr.mxu0 0.0
    %291 = vmatpush1.msra.mxu0 %v68
    %292 = vmatprep.subr.mxu0 0.0
    %293 = vmatpush2.msra.mxu0 0.0
    %294 = vmatprep.subr.mxu0 0.0
    %295 = vmatpush2.msra.mxu0 0.0
    %296 = vmatprep.subr.mxu0 0.0
    %297 = vmatpush2.msra.mxu0 0.0
    %298 = vmatprep.subr.mxu0 0.0
    %299 = vmatpush2.msra.mxu0 0.0
    %300 = vmatprep.subr.mxu0 0.0
    %301 = vmatpush2.msra.mxu0 0.0
    %302 = vmatprep.subr.mxu0 0.0
    %303 = vmatpush2.msra.mxu0 0.0
    %304 = vmatprep.subr.mxu0 0.0
    %305 = vmatpush2.msra.mxu0 0.0
    %306 = vmatprep.subr.mxu0 0.0
    %307 = vmatpush2.msra.mxu0 0.0
    %308 = vmatprep.subr.mxu0 0.0
    %309 = vmatpush2.msra.mxu0 0.0
    %310 = vmatprep.subr.mxu0 0.0
    %311 = vmatpush2.msra.mxu0 0.0
    %312 = vmatprep.subr.mxu0 0.0
    %313 = vmatpush2.msra.mxu0 0.0
    %314 = vmatprep.subr.mxu0 0.0
    %315 = vmatpush2.msra.mxu0 0.0
    %316 = vmatprep.subr.mxu0 0.0
    %317 = vmatpush2.msra.mxu0 0.0
    %318 = vmatprep.subr.mxu0 0.0
    %319 = vmatpush2.msra.mxu0 0.0
    %320 = vmatprep.subr.mxu0 0.0
    %321 = vmatpush2.msra.mxu0 0.0
    %322 = vmatprep.subr.mxu0 0.0
    %323 = vmatpush2.msra.mxu0 0.0
    %324 = vmatprep.mubr.f32.mxu0 0.0
    %325 = vmatmul.mubr.f32.gmra.mxu0 %v253
    %v326 = vpop.f32.mrf.mxu0
    %v327 = vadd.f32 0.0, %v326
    %v328 = vpop.f32.mrf.mxu0
    %329 = vdwg.mxu0
    %v330 = vadd.f32 %v259, %v327
    %v331 = vtanh.pop %v330
    %332 = vset.pattern.permute.xlu0 3
    %333 = vperm.xlu0 %332, %v84
    %v334 = vpop.permute.xlu0 %333
    %v336 = vmul.f32 %v334, %v94
    %v337 = vadd.f32 %v336, %v101
    %338 = vmatprep.subr.mxu0 0.0
    %339 = vmatpush1.msra.mxu0 %v83
    %340 = vmatprep.subr.mxu0 0.0
    %341 = vmatpush1.msra.mxu0 %v82
    %342 = vmatprep.subr.mxu0 0.0
    %343 = vmatpush1.msra.mxu0 %v81
    %344 = vmatprep.subr.mxu0 0.0
    %345 = vmatpush1.msra.mxu0 %v80
    %346 = vmatprep.subr.mxu0 0.0
    %347 = vmatpush1.msra.mxu0 %v79
    %348 = vmatprep.subr.mxu0 0.0
    %349 = vmatpush1.msra.mxu0 %v78
    %350 = vmatprep.subr.mxu0 0.0
    %351 = vmatpush1.msra.mxu0 %v77
    %352 = vmatprep.subr.mxu0 0.0
    %353 = vmatpush1.msra.mxu0 %v76
    %354 = vmatprep.subr.mxu0 0.0
    %355 = vmatpush1.msra.mxu0 %v75
    %356 = vmatprep.subr.mxu0 0.0
    %357 = vmatpush1.msra.mxu0 %v74
    %358 = vmatprep.subr.mxu0 0.0
    %359 = vmatpush1.msra.mxu0 %v73
    %360 = vmatprep.subr.mxu0 0.0
    %361 = vmatpush1.msra.mxu0 %v72
    %362 = vmatprep.subr.mxu0 0.0
    %363 = vmatpush1.msra.mxu0 %v71
    %364 = vmatprep.subr.mxu0 0.0
    %365 = vmatpush1.msra.mxu0 %v70
    %366 = vmatprep.subr.mxu0 0.0
    %367 = vmatpush1.msra.mxu0 %v69
    %368 = vmatprep.subr.mxu0 0.0
    %369 = vmatpush1.msra.mxu0 %v68
    %370 = vmatprep.subr.mxu0 0.0
    %371 = vmatpush2.msra.mxu0 0.0
    %372 = vmatprep.subr.mxu0 0.0
    %373 = vmatpush2.msra.mxu0 0.0
    %374 = vmatprep.subr.mxu0 0.0
    %375 = vmatpush2.msra.mxu0 0.0
    %376 = vmatprep.subr.mxu0 0.0
    %377 = vmatpush2.msra.mxu0 0.0
    %378 = vmatprep.subr.mxu0 0.0
    %379 = vmatpush2.msra.mxu0 0.0
    %380 = vmatprep.subr.mxu0 0.0
    %381 = vmatpush2.msra.mxu0 0.0
    %382 = vmatprep.subr.mxu0 0.0
    %383 = vmatpush2.msra.mxu0 0.0
    %384 = vmatprep.subr.mxu0 0.0
    %385 = vmatpush2.msra.mxu0 0.0
    %386 = vmatprep.subr.mxu0 0.0
    %387 = vmatpush2.msra.mxu0 0.0
    %388 = vmatprep.subr.mxu0 0.0
    %389 = vmatpush2.msra.mxu0 0.0
    %390 = vmatprep.subr.mxu0 0.0
    %391 = vmatpush2.msra.mxu0 0.0
    %392 = vmatprep.subr.mxu0 0.0
    %393 = vmatpush2.msra.mxu0 0.0
    %394 = vmatprep.subr.mxu0 0.0
    %395 = vmatpush2.msra.mxu0 0.0
    %396 = vmatprep.subr.mxu0 0.0
    %397 = vmatpush2.msra.mxu0 0.0
    %398 = vmatprep.subr.mxu0 0.0
    %399 = vmatpush2.msra.mxu0 0.0
    %400 = vmatprep.subr.mxu0 0.0
    %401 = vmatpush2.msra.mxu0 0.0
    %402 = vmatprep.mubr.f32.mxu0 0.0
    %403 = vmatmul.mubr.f32.gmra.mxu0 %v331
    %v404 = vpop.f32.mrf.mxu0
    %v405 = vadd.f32 0.0, %v404
    %v406 = vpop.f32.mrf.mxu0
    %407 = vdwg.mxu0
    %v408 = vadd.f32 %v337, %v405
    %v409 = vtanh.pop %v408
    %410 = vset.pattern.permute.xlu0 4
    %411 = vperm.xlu0 %410, %v84
    %v412 = vpop.permute.xlu0 %411
    %v414 = vmul.f32 %v412, %v94
    %v415 = vadd.f32 %v414, %v101
    %416 = vmatprep.subr.mxu0 0.0
    %417 = vmatpush1.msra.mxu0 %v83
    %418 = vmatprep.subr.mxu0 0.0
    %419 = vmatpush1.msra.mxu0 %v82
    %420 = vmatprep.subr.mxu0 0.0
    %421 = vmatpush1.msra.mxu0 %v81
    %422 = vmatprep.subr.mxu0 0.0
    %423 = vmatpush1.msra.mxu0 %v80
    %424 = vmatprep.subr.mxu0 0.0
    %425 = vmatpush1.msra.mxu0 %v79
    %426 = vmatprep.subr.mxu0 0.0
    %427 = vmatpush1.msra.mxu0 %v78
    %428 = vmatprep.subr.mxu0 0.0
    %429 = vmatpush1.msra.mxu0 %v77
    %430 = vmatprep.subr.mxu0 0.0
    %431 = vmatpush1.msra.mxu0 %v76
    %432 = vmatprep.subr.mxu0 0.0
    %433 = vmatpush1.msra.mxu0 %v75
    %434 = vmatprep.subr.mxu0 0.0
    %435 = vmatpush1.msra.mxu0 %v74
    %436 = vmatprep.subr.mxu0 0.0
    %437 = vmatpush1.msra.mxu0 %v73
    %438 = vmatprep.subr.mxu0 0.0
    %439 = vmatpush1.msra.mxu0 %v72
    %440 = vmatprep.subr.mxu0 0.0
    %441 = vmatpush1.msra.mxu0 %v71
    %442 = vmatprep.subr.mxu0 0.0
    %443 = vmatpush1.msra.mxu0 %v70
    %444 = vmatprep.subr.mxu0 0.0
    %445 = vmatpush1.msra.mxu0 %v69
    %446 = vmatprep.subr.mxu0 0.0
    %447 = vmatpush1.msra.mxu0 %v68
    %448 = vmatprep.subr.mxu0 0.0
    %449 = vmatpush2.msra.mxu0 0.0
    %450 = vmatprep.subr.mxu0 0.0
    %451 = vmatpush2.msra.mxu0 0.0
    %452 = vmatprep.subr.mxu0 0.0
    %453 = vmatpush2.msra.mxu0 0.0
    %454 = vmatprep.subr.mxu0 0.0
    %455 = vmatpush2.msra.mxu0 0.0
    %456 = vmatprep.subr.mxu0 0.0
    %457 = vmatpush2.msra.mxu0 0.0
    %458 = vmatprep.subr.mxu0 0.0
    %459 = vmatpush2.msra.mxu0 0.0
    %460 = vmatprep.subr.mxu0 0.0
    %461 = vmatpush2.msra.mxu0 0.0
    %462 = vmatprep.subr.mxu0 0.0
    %463 = vmatpush2.msra.mxu0 0.0
    %464 = vmatprep.subr.mxu0 0.0
    %465 = vmatpush2.msra.mxu0 0.0
    %466 = vmatprep.subr.mxu0 0.0
    %467 = vmatpush2.msra.mxu0 0.0
    %468 = vmatprep.subr.mxu0 0.0
    %469 = vmatpush2.msra.mxu0 0.0
    %470 = vmatprep.subr.mxu0 0.0
    %471 = vmatpush2.msra.mxu0 0.0
    %472 = vmatprep.subr.mxu0 0.0
    %473 = vmatpush2.msra.mxu0 0.0
    %474 = vmatprep.subr.mxu0 0.0
    %475 = vmatpush2.msra.mxu0 0.0
    %476 = vmatprep.subr.mxu0 0.0
    %477 = vmatpush2.msra.mxu0 0.0
    %478 = vmatprep.subr.mxu0 0.0
    %479 = vmatpush2.msra.mxu0 0.0
    %480 = vmatprep.mubr.f32.mxu0 0.0
    %481 = vmatmul.mubr.f32.gmra.mxu0 %v409
    %v482 = vpop.f32.mrf.mxu0
    %v483 = vadd.f32 0.0, %v482
    %v484 = vpop.f32.mrf.mxu0
    %485 = vdwg.mxu0
    %v486 = vadd.f32 %v415, %v483
    %v487 = vtanh.pop %v486
    %488 = vset.pattern.permute.xlu0 5
    %489 = vperm.xlu0 %488, %v84
    %v490 = vpop.permute.xlu0 %489
    %v492 = vmul.f32 %v490, %v94
    %v493 = vadd.f32 %v492, %v101
    %494 = vmatprep.subr.mxu0 0.0
    %495 = vmatpush1.msra.mxu0 %v83
    %496 = vmatprep.subr.mxu0 0.0
    %497 = vmatpush1.msra.mxu0 %v82
    %498 = vmatprep.subr.mxu0 0.0
    %499 = vmatpush1.msra.mxu0 %v81
    %500 = vmatprep.subr.mxu0 0.0
    %501 = vmatpush1.msra.mxu0 %v80
    %502 = vmatprep.subr.mxu0 0.0
    %503 = vmatpush1.msra.mxu0 %v79
    %504 = vmatprep.subr.mxu0 0.0
    %505 = vmatpush1.msra.mxu0 %v78
    %506 = vmatprep.subr.mxu0 0.0
    %507 = vmatpush1.msra.mxu0 %v77
    %508 = vmatprep.subr.mxu0 0.0
    %509 = vmatpush1.msra.mxu0 %v76
    %510 = vmatprep.subr.mxu0 0.0
    %511 = vmatpush1.msra.mxu0 %v75
    %512 = vmatprep.subr.mxu0 0.0
    %513 = vmatpush1.msra.mxu0 %v74
    %514 = vmatprep.subr.mxu0 0.0
    %515 = vmatpush1.msra.mxu0 %v73
    %516 = vmatprep.subr.mxu0 0.0
    %517 = vmatpush1.msra.mxu0 %v72
    %518 = vmatprep.subr.mxu0 0.0
    %519 = vmatpush1.msra.mxu0 %v71
    %520 = vmatprep.subr.mxu0 0.0
    %521 = vmatpush1.msra.mxu0 %v70
    %522 = vmatprep.subr.mxu0 0.0
    %523 = vmatpush1.msra.mxu0 %v69
    %524 = vmatprep.subr.mxu0 0.0
    %525 = vmatpush1.msra.mxu0 %v68
    %526 = vmatprep.subr.mxu0 0.0
    %527 = vmatpush2.msra.mxu0 0.0
    %528 = vmatprep.subr.mxu0 0.0
    %529 = vmatpush2.msra.mxu0 0.0
    %530 = vmatprep.subr.mxu0 0.0
    %531 = vmatpush2.msra.mxu0 0.0
    %532 = vmatprep.subr.mxu0 0.0
    %533 = vmatpush2.msra.mxu0 0.0
    %534 = vmatprep.subr.mxu0 0.0
    %535 = vmatpush2.msra.mxu0 0.0
    %536 = vmatprep.subr.mxu0 0.0
    %537 = vmatpush2.msra.mxu0 0.0
    %538 = vmatprep.subr.mxu0 0.0
    %539 = vmatpush2.msra.mxu0 0.0
    %540 = vmatprep.subr.mxu0 0.0
    %541 = vmatpush2.msra.mxu0 0.0
    %542 = vmatprep.subr.mxu0 0.0
    %543 = vmatpush2.msra.mxu0 0.0
    %544 = vmatprep.subr.mxu0 0.0
    %545 = vmatpush2.msra.mxu0 0.0
    %546 = vmatprep.subr.mxu0 0.0
    %547 = vmatpush2.msra.mxu0 0.0
    %548 = vmatprep.subr.mxu0 0.0
    %549 = vmatpush2.msra.mxu0 0.0
    %550 = vmatprep.subr.mxu0 0.0
    %551 = vmatpush2.msra.mxu0 0.0
    %552 = vmatprep.subr.mxu0 0.0
    %553 = vmatpush2.msra.mxu0 0.0
    %554 = vmatprep.subr.mxu0 0.0
    %555 = vmatpush2.msra.mxu0 0.0
    %556 = vmatprep.subr.mxu0 0.0
    %557 = vmatpush2.msra.mxu0 0.0
    %558 = vmatprep.mubr.f32.mxu0 0.0
    %559 = vmatmul.mubr.f32.gmra.mxu0 %v487
    %v560 = vpop.f32.mrf.mxu0
    %v561 = vadd.f32 0.0, %v560
    %v562 = vpop.f32.mrf.mxu0
    %563 = vdwg.mxu0
    %v564 = vadd.f32 %v493, %v561
    %v565 = vtanh.pop %v564
    %566 = vset.pattern.permute.xlu0 6
    %567 = vperm.xlu0 %566, %v84
    %v568 = vpop.permute.xlu0 %567
    %v570 = vmul.f32 %v568, %v94
    %v571 = vadd.f32 %v570, %v101
    %572 = vmatprep.subr.mxu0 0.0
    %573 = vmatpush1.msra.mxu0 %v83
    %574 = vmatprep.subr.mxu0 0.0
    %575 = vmatpush1.msra.mxu0 %v82
    %576 = vmatprep.subr.mxu0 0.0
    %577 = vmatpush1.msra.mxu0 %v81
    %578 = vmatprep.subr.mxu0 0.0
    %579 = vmatpush1.msra.mxu0 %v80
    %580 = vmatprep.subr.mxu0 0.0
    %581 = vmatpush1.msra.mxu0 %v79
    %582 = vmatprep.subr.mxu0 0.0
    %583 = vmatpush1.msra.mxu0 %v78
    %584 = vmatprep.subr.mxu0 0.0
    %585 = vmatpush1.msra.mxu0 %v77
    %586 = vmatprep.subr.mxu0 0.0
    %587 = vmatpush1.msra.mxu0 %v76
    %588 = vmatprep.subr.mxu0 0.0
    %589 = vmatpush1.msra.mxu0 %v75
    %590 = vmatprep.subr.mxu0 0.0
    %591 = vmatpush1.msra.mxu0 %v74
    %592 = vmatprep.subr.mxu0 0.0
    %593 = vmatpush1.msra.mxu0 %v73
    %594 = vmatprep.subr.mxu0 0.0
    %595 = vmatpush1.msra.mxu0 %v72
    %596 = vmatprep.subr.mxu0 0.0
    %597 = vmatpush1.msra.mxu0 %v71
    %598 = vmatprep.subr.mxu0 0.0
    %599 = vmatpush1.msra.mxu0 %v70
    %600 = vmatprep.subr.mxu0 0.0
    %601 = vmatpush1.msra.mxu0 %v69
    %602 = vmatprep.subr.mxu0 0.0
    %603 = vmatpush1.msra.mxu0 %v68
    %604 = vmatprep.subr.mxu0 0.0
    %605 = vmatpush2.msra.mxu0 0.0
    %606 = vmatprep.subr.mxu0 0.0
    %607 = vmatpush2.msra.mxu0 0.0
    %608 = vmatprep.subr.mxu0 0.0
    %609 = vmatpush2.msra.mxu0 0.0
    %610 = vmatprep.subr.mxu0 0.0
    %611 = vmatpush2.msra.mxu0 0.0
    %612 = vmatprep.subr.mxu0 0.0
    %613 = vmatpush2.msra.mxu0 0.0
    %614 = vmatprep.subr.mxu0 0.0
    %615 = vmatpush2.msra.mxu0 0.0
    %616 = vmatprep.subr.mxu0 0.0
    %617 = vmatpush2.msra.mxu0 0.0
    %618 = vmatprep.subr.mxu0 0.0
    %619 = vmatpush2.msra.mxu0 0.0
    %620 = vmatprep.subr.mxu0 0.0
    %621 = vmatpush2.msra.mxu0 0.0
    %622 = vmatprep.subr.mxu0 0.0
    %623 = vmatpush2.msra.mxu0 0.0
    %624 = vmatprep.subr.mxu0 0.0
    %625 = vmatpush2.msra.mxu0 0.0
    %626 = vmatprep.subr.mxu0 0.0
    %627 = vmatpush2.msra.mxu0 0.0
    %628 = vmatprep.subr.mxu0 0.0
    %629 = vmatpush2.msra.mxu0 0.0
    %630 = vmatprep.subr.mxu0 0.0
    %631 = vmatpush2.msra.mxu0 0.0
    %632 = vmatprep.subr.mxu0 0.0
    %633 = vmatpush2.msra.mxu0 0.0
    %634 = vmatprep.subr.mxu0 0.0
    %635 = vmatpush2.msra.mxu0 0.0
    %636 = vmatprep.mubr.f32.mxu0 0.0
    %637 = vmatmul.mubr.f32.gmra.mxu0 %v565
    %v638 = vpop.f32.mrf.mxu0
    %v639 = vadd.f32 0.0, %v638
    %v640 = vpop.f32.mrf.mxu0
    %641 = vdwg.mxu0
    %v642 = vadd.f32 %v571, %v639
    %v643 = vtanh.pop %v642
    %644 = vset.pattern.permute.xlu0 7
    %645 = vperm.xlu0 %644, %v84
    %v646 = vpop.permute.xlu0 %645
    %v648 = vmul.f32 %v646, %v94
    %v649 = vadd.f32 %v648, %v101
    %650 = vmatprep.subr.mxu0 0.0
    %651 = vmatpush1.msra.mxu0 %v83
    %652 = vmatprep.subr.mxu0 0.0
    %653 = vmatpush1.msra.mxu0 %v82
    %654 = vmatprep.subr.mxu0 0.0
    %655 = vmatpush1.msra.mxu0 %v81
    %656 = vmatprep.subr.mxu0 0.0
    %657 = vmatpush1.msra.mxu0 %v80
    %658 = vmatprep.subr.mxu0 0.0
    %659 = vmatpush1.msra.mxu0 %v79
    %660 = vmatprep.subr.mxu0 0.0
    %661 = vmatpush1.msra.mxu0 %v78
    %662 = vmatprep.subr.mxu0 0.0
    %663 = vmatpush1.msra.mxu0 %v77
    %664 = vmatprep.subr.mxu0 0.0
    %665 = vmatpush1.msra.mxu0 %v76
    %666 = vmatprep.subr.mxu0 0.0
    %667 = vmatpush1.msra.mxu0 %v75
    %668 = vmatprep.subr.mxu0 0.0
    %669 = vmatpush1.msra.mxu0 %v74
    %670 = vmatprep.subr.mxu0 0.0
    %671 = vmatpush1.msra.mxu0 %v73
    %672 = vmatprep.subr.mxu0 0.0
    %673 = vmatpush1.msra.mxu0 %v72
    %674 = vmatprep.subr.mxu0 0.0
    %675 = vmatpush1.msra.mxu0 %v71
    %676 = vmatprep.subr.mxu0 0.0
    %677 = vmatpush1.msra.mxu0 %v70
    %678 = vmatprep.subr.mxu0 0.0
    %679 = vmatpush1.msra.mxu0 %v69
    %680 = vmatprep.subr.mxu0 0.0
    %681 = vmatpush1.msra.mxu0 %v68
    %682 = vmatprep.subr.mxu0 0.0
    %683 = vmatpush2.msra.mxu0 0.0
    %684 = vmatprep.subr.mxu0 0.0
    %685 = vmatpush2.msra.mxu0 0.0
    %686 = vmatprep.subr.mxu0 0.0
    %687 = vmatpush2.msra.mxu0 0.0
    %688 = vmatprep.subr.mxu0 0.0
    %689 = vmatpush2.msra.mxu0 0.0
    %690 = vmatprep.subr.mxu0 0.0
    %691 = vmatpush2.msra.mxu0 0.0
    %692 = vmatprep.subr.mxu0 0.0
    %693 = vmatpush2.msra.mxu0 0.0
    %694 = vmatprep.subr.mxu0 0.0
    %695 = vmatpush2.msra.mxu0 0.0
    %696 = vmatprep.subr.mxu0 0.0
    %697 = vmatpush2.msra.mxu0 0.0
    %698 = vmatprep.subr.mxu0 0.0
    %699 = vmatpush2.msra.mxu0 0.0
    %700 = vmatprep.subr.mxu0 0.0
    %701 = vmatpush2.msra.mxu0 0.0
    %702 = vmatprep.subr.mxu0 0.0
    %703 = vmatpush2.msra.mxu0 0.0
    %704 = vmatprep.subr.mxu0 0.0
    %705 = vmatpush2.msra.mxu0 0.0
    %706 = vmatprep.subr.mxu0 0.0
    %707 = vmatpush2.msra.mxu0 0.0
    %708 = vmatprep.subr.mxu0 0.0
    %709 = vmatpush2.msra.mxu0 0.0
    %710 = vmatprep.subr.mxu0 0.0
    %711 = vmatpush2.msra.mxu0 0.0
    %712 = vmatprep.subr.mxu0 0.0
    %713 = vmatpush2.msra.mxu0 0.0
    %714 = vmatprep.mubr.f32.mxu0 0.0
    %715 = vmatmul.mubr.f32.gmra.mxu0 %v643
    %v716 = vpop.f32.mrf.mxu0
    %v717 = vadd.f32 0.0, %v716
    %v718 = vpop.f32.mrf.mxu0
    %719 = vdwg.mxu0
    %v720 = vadd.f32 %v649, %v717
    %v721 = vtanh.pop %v720
    %722 = vst [vmem:[#allocation8] sm:$0xff] %v721
    %v723 = vld [vmem:[#allocation7] sm:$0xff]
    %v724 = vld [vmem:[#allocation7 + $0x8] sm:$0xff]
    %v725 = vld [vmem:[#allocation7 + $0x10] sm:$0xff]
    %v726 = vld [vmem:[#allocation7 + $0x18] sm:$0xff]
    %v727 = vld [vmem:[#allocation7 + $0x20] sm:$0xff]
    %v728 = vld [vmem:[#allocation7 + $0x28] sm:$0xff]
    %v729 = vld [vmem:[#allocation7 + $0x30] sm:$0xff]
    %v730 = vld [vmem:[#allocation7 + $0x38] sm:$0xff]
    %v731 = vld [vmem:[#allocation7 + $0x40] sm:$0xff]
    %v732 = vld [vmem:[#allocation7 + $0x48] sm:$0xff]
    %v733 = vld [vmem:[#allocation7 + $0x50] sm:$0xff]
    %v734 = vld [vmem:[#allocation7 + $0x58] sm:$0xff]
    %v735 = vld [vmem:[#allocation7 + $0x60] sm:$0xff]
    %v736 = vld [vmem:[#allocation7 + $0x68] sm:$0xff]
    %v737 = vld [vmem:[#allocation7 + $0x70] sm:$0xff]
    %v738 = vld [vmem:[#allocation7 + $0x78] sm:$0xff]
    %v739 = vld [vmem:[%s5] sm:$0x1]
    %v741 = vlaneseq
    %v742 = vshrl.u32 %v741, 7
    %v743 = vsub.s32 0, %v742
    %v744 = vrot.slane %v739, %v743
    %746 = vmatprep.subr.mxu0 0.0
    %747 = vmatpush1.msra.mxu0 %v738
    %748 = vmatprep.subr.mxu0 0.0
    %749 = vmatpush1.msra.mxu0 %v737
    %750 = vmatprep.subr.mxu0 0.0
    %751 = vmatpush1.msra.mxu0 %v736
    %752 = vmatprep.subr.mxu0 0.0
    %753 = vmatpush1.msra.mxu0 %v735
    %754 = vmatprep.subr.mxu0 0.0
    %755 = vmatpush1.msra.mxu0 %v734
    %756 = vmatprep.subr.mxu0 0.0
    %757 = vmatpush1.msra.mxu0 %v733
    %758 = vmatprep.subr.mxu0 0.0
    %759 = vmatpush1.msra.mxu0 %v732
    %760 = vmatprep.subr.mxu0 0.0
    %761 = vmatpush1.msra.mxu0 %v731
    %762 = vmatprep.subr.mxu0 0.0
    %763 = vmatpush1.msra.mxu0 %v730
    %764 = vmatprep.subr.mxu0 0.0
    %765 = vmatpush1.msra.mxu0 %v729
    %766 = vmatprep.subr.mxu0 0.0
    %767 = vmatpush1.msra.mxu0 %v728
    %768 = vmatprep.subr.mxu0 0.0
    %769 = vmatpush1.msra.mxu0 %v727
    %770 = vmatprep.subr.mxu0 0.0
    %771 = vmatpush1.msra.mxu0 %v726
    %772 = vmatprep.subr.mxu0 0.0
    %773 = vmatpush1.msra.mxu0 %v725
    %774 = vmatprep.subr.mxu0 0.0
    %775 = vmatpush1.msra.mxu0 %v724
    %776 = vmatprep.subr.mxu0 0.0
    %777 = vmatpush1.msra.mxu0 %v723
    %778 = vmatprep.subr.mxu0 0.0
    %779 = vmatpush2.msra.mxu0 0.0
    %780 = vmatprep.subr.mxu0 0.0
    %781 = vmatpush2.msra.mxu0 0.0
    %782 = vmatprep.subr.mxu0 0.0
    %783 = vmatpush2.msra.mxu0 0.0
    %784 = vmatprep.subr.mxu0 0.0
    %785 = vmatpush2.msra.mxu0 0.0
    %786 = vmatprep.subr.mxu0 0.0
    %787 = vmatpush2.msra.mxu0 0.0
    %788 = vmatprep.subr.mxu0 0.0
    %789 = vmatpush2.msra.mxu0 0.0
    %790 = vmatprep.subr.mxu0 0.0
    %791 = vmatpush2.msra.mxu0 0.0
    %792 = vmatprep.subr.mxu0 0.0
    %793 = vmatpush2.msra.mxu0 0.0
    %794 = vmatprep.subr.mxu0 0.0
    %795 = vmatpush2.msra.mxu0 0.0
    %796 = vmatprep.subr.mxu0 0.0
    %797 = vmatpush2.msra.mxu0 0.0
    %798 = vmatprep.subr.mxu0 0.0
    %799 = vmatpush2.msra.mxu0 0.0
    %800 = vmatprep.subr.mxu0 0.0
    %801 = vmatpush2.msra.mxu0 0.0
    %802 = vmatprep.subr.mxu0 0.0
    %803 = vmatpush2.msra.mxu0 0.0
    %804 = vmatprep.subr.mxu0 0.0
    %805 = vmatpush2.msra.mxu0 0.0
    %806 = vmatprep.subr.mxu0 0.0
    %807 = vmatpush2.msra.mxu0 0.0
    %808 = vmatprep.subr.mxu0 0.0
    %809 = vmatpush2.msra.mxu0 0.0
    %810 = vmatprep.mubr.f32.mxu0 0.0
    %811 = vmatmul.mubr.f32.gmra.mxu0 %v721
    %v812 = vpop.f32.mrf.mxu0
    %v813 = vadd.f32 %v744, %v812
    %v814 = vpop.f32.mrf.mxu0
    %815 = vdwg.mxu0
    %816 = vst [vmem:[#allocation9] sm:$0xff] %v813
    // Predicated region
    $region38: #{tpu_custom_call.1} parent=1 // pred_check
      _
    $region39: #{tpu_custom_call.1} parent=1 // pred_check_branch
      %818 = sbr.rel (0) target = $region41
    $region40: #{tpu_custom_call.1} parent=1 // pred_region
      %s820 = ssub.s32 128, 128
      %821 = vsyncadd [#allocation4], %s820
      %s823 = sshll.u32 [#allocation8], 4
      %s824 = int_to_ptr.vmem [resolvable:$true] %s823
      %826 = dma.vmem_to_hbm [thread:$0]  %s824, 128, %s6, [#allocation4]
    $region41: #{tpu_custom_call.1} parent=1 // pred_fallthru
      _
    // Predicated region
    $region42: #{tpu_custom_call.1} parent=1 // pred_check
      _
    $region43: #{tpu_custom_call.1} parent=1 // pred_check_branch
      %828 = sbr.rel (0) target = $region45
    $region44: #{tpu_custom_call.1} parent=1 // pred_region
      %s830 = ssub.s32 128, 128
      %831 = vsyncadd [#allocation10], %s830
      %s833 = sshll.u32 [#allocation9], 4
      %s834 = int_to_ptr.vmem [resolvable:$true] %s833
      %836 = dma.vmem_to_hbm [thread:$0]  %s834, 128, %s7, [#allocation10]
    $region45: #{tpu_custom_call.1} parent=1 // pred_fallthru
      _
    // Predicated region
    $region46: #{tpu_custom_call.1} parent=1 // pred_check
      _
    $region47: #{tpu_custom_call.1} parent=1 // pred_check_branch
      %838 = sbr.rel (0) target = $region49
    $region48: #{tpu_custom_call.1} parent=1 // pred_region
      %839 = dma.done [#allocation4], 128
    $region49: #{tpu_custom_call.1} parent=1 // pred_fallthru
      _
    // Predicated region
    $region50: #{tpu_custom_call.1} parent=1 // pred_check
      _
    $region51: #{tpu_custom_call.1} parent=1 // pred_check_branch
      %841 = sbr.rel (0) target = $region53
    $region52: #{tpu_custom_call.1} parent=1 // pred_region
      %842 = dma.done [#allocation10], 128
    $region53: #{tpu_custom_call.1} parent=1 // pred_fallthru
      _
    %843 = vsyncpa [#allocation3], 1
    %844 = vsyncpa [#allocation6], 1
    %845 = vsyncpa [#allocation4], 1
    %846 = vsyncpa [#allocation10], 1

</llo_original>
